<compile_context>
chip_gen: v6e
topology: v6e:2x2x1
jax: 0.10.0
libtpu: 0.0.40
codegen_flags: <defaults>
</compile_context>

<pallas_src>
import jax
import jax.numpy as jnp
from jax.experimental import pallas as pl
from jax.experimental.pallas import tpu as pltpu

# Small, module-consistent shapes (synthetic config.ws / config.max_len)
VOCAB = 50          # len(config.ws)
EMBED_DIM = 300     # embedding_dim=300 (as in the module)
MAX_LEN = 8         # config.max_len
PAD_IDX = 0         # config.ws.PAD
NUM_CLASSES = 2
BATCH = 2


# ---------------------------------------------------------------------------
# Single fused kernel (no grid):
#   ids (SMEM, (B, L) int32)  ->  folded-table lookups (VMEM, (L*V, C) f32)
#   -> accumulate + bias -> log_softmax -> out (B, C) f32
# B and L are tiny and static, so both loops are fully unrolled Python loops:
# 16 dynamic-sublane reads + 16 VPU adds + a 2-lane log_softmax epilogue.
# ---------------------------------------------------------------------------
def _fused_fold_kernel(ids_ref, t_ref, bias_ref, out_ref):
    b_n, l_n = ids_ref.shape
    v_n = t_ref.shape[0] // l_n
    bias_v = bias_ref[...]                                   # (1, C), hoisted

    rows = []
    for b in range(b_n):                                     # static unroll
        acc = bias_v
        for l in range(l_n):                                 # static unroll
            tok = ids_ref[b, l]                              # scalar int32 (SMEM)
            acc = acc + t_ref[pl.ds(l * v_n + tok, 1), :]    # (1, C) row read
        rows.append(acc)

    logits = jnp.concatenate(rows, axis=0)                   # (B, C)
    m = jnp.max(logits, axis=-1, keepdims=True)
    lse = m + jnp.log(jnp.sum(jnp.exp(logits - m), axis=-1, keepdims=True))
    out_ref[...] = logits - lse


# ---------------------------------------------------------------------------
# Forward wrapper.  The einsum is one-time weight preprocessing in plain JAX;
# the Pallas kernel does the whole per-example forward in a single dispatch.
# ---------------------------------------------------------------------------
def model_forward(ids, emb_table, w_t, bias):
    b, l = ids.shape
    v, e = emb_table.shape
    c = w_t.shape[1]

    # Exact fold of (embedding gather -> flatten -> Linear):
    #   T[l, v, c] = sum_e emb[v, e] * W[l*E + e, c], flattened to (L*V, C).
    t = jnp.einsum("ve,lec->lvc", emb_table, w_t.reshape(l, e, c))
    t = t.reshape(l * v, c).astype(jnp.float32)
    bias2 = bias.reshape(1, c).astype(jnp.float32)

    return pl.pallas_call(
        _fused_fold_kernel,
        out_shape=jax.ShapeDtypeStruct((b, c), jnp.float32),
        in_specs=[
            pl.BlockSpec(memory_space=pltpu.MemorySpace.SMEM),   # ids
            pl.BlockSpec(memory_space=pltpu.MemorySpace.VMEM),   # folded table
            pl.BlockSpec(memory_space=pltpu.MemorySpace.VMEM),   # bias
        ],
        out_specs=pl.BlockSpec(memory_space=pltpu.MemorySpace.VMEM),
    )(ids.astype(jnp.int32), t, bias2)


def _reference(ids, emb_table, w_t, bias):
    emb = emb_table[ids]                                     # (B, L, E)
    x = emb.reshape(ids.shape[0], -1)
    logits = x @ w_t + bias
    return jax.nn.log_softmax(logits, axis=-1)


if __name__ == "__main__":
    key = jax.random.PRNGKey(0)
    k_emb, k_w, k_b, k_ids = jax.random.split(key, 4)

    # Deterministic parameter init (nn.Embedding ~ N(0,1), padding row zeroed;
    # nn.Linear ~ U(-1/sqrt(fan_in), 1/sqrt(fan_in))).
    emb_table = jax.random.normal(k_emb, (VOCAB, EMBED_DIM), jnp.float32)
    emb_table = emb_table.at[PAD_IDX].set(0.0)

    fan_in = MAX_LEN * EMBED_DIM
    bound = 1.0 / (fan_in ** 0.5)
    w_t = jax.random.uniform(k_w, (fan_in, NUM_CLASSES), jnp.float32,
                             -bound, bound)                  # transposed Linear weight
    bias = jax.random.uniform(k_b, (NUM_CLASSES,), jnp.float32, -bound, bound)

    ids = jax.random.randint(k_ids, (BATCH, MAX_LEN), 0, VOCAB, jnp.int32)

    fwd = jax.jit(model_forward)
    out = jax.block_until_ready(fwd(ids, emb_table, w_t, bias))

    ref = _reference(ids, emb_table, w_t, bias)
    assert out.shape == (BATCH, NUM_CLASSES)
    assert jnp.allclose(out, ref, atol=1e-4, rtol=1e-4)

    print("KERNEL_OK")
</pallas_src>

<mosaic_0001>
module attributes {stable_mosaic.version = 11 : i64} {
  func.func @_fused_fold_kernel(%arg0: memref<2x8xi32, #tpu.memory_space<smem>>, %arg1: memref<400x2xf32, #tpu.memory_space<vmem>>, %arg2: memref<1x2xf32, #tpu.memory_space<vmem>>, %arg3: memref<2x2xf32, #tpu.memory_space<vmem>>) attributes {dimension_semantics = [], scalar_prefetch = 0 : i64, scratch_operands = 0 : i64, tpu.core_type = #tpu.core_type<tc>} {
    %c0 = arith.constant 0 : index
    %c0_0 = arith.constant 0 : index
    %0 = vector.load %arg2[%c0, %c0_0] : memref<1x2xf32, #tpu.memory_space<vmem>>, vector<1x2xf32>
    %c0_1 = arith.constant 0 : index
    %c0_2 = arith.constant 0 : index
    %1 = memref.load %arg0[%c0_1, %c0_2] : memref<2x8xi32, #tpu.memory_space<smem>>
    %c0_i32 = arith.constant 0 : i32
    %2 = arith.addi %c0_i32, %1 : i32
    %3 = arith.index_cast %2 : i32 to index
    %c0_3 = arith.constant 0 : index
    %4 = vector.load %arg1[%3, %c0_3] : memref<400x2xf32, #tpu.memory_space<vmem>>, vector<1x2xf32>
    %5 = arith.addf %0, %4 : vector<1x2xf32>
    %c0_4 = arith.constant 0 : index
    %c1 = arith.constant 1 : index
    %6 = memref.load %arg0[%c0_4, %c1] : memref<2x8xi32, #tpu.memory_space<smem>>
    %c50_i32 = arith.constant 50 : i32
    %7 = arith.addi %c50_i32, %6 : i32
    %8 = arith.index_cast %7 : i32 to index
    %c0_5 = arith.constant 0 : index
    %9 = vector.load %arg1[%8, %c0_5] : memref<400x2xf32, #tpu.memory_space<vmem>>, vector<1x2xf32>
    %10 = arith.addf %5, %9 : vector<1x2xf32>
    %c0_6 = arith.constant 0 : index
    %c2 = arith.constant 2 : index
    %11 = memref.load %arg0[%c0_6, %c2] : memref<2x8xi32, #tpu.memory_space<smem>>
    %c100_i32 = arith.constant 100 : i32
    %12 = arith.addi %c100_i32, %11 : i32
    %13 = arith.index_cast %12 : i32 to index
    %c0_7 = arith.constant 0 : index
    %14 = vector.load %arg1[%13, %c0_7] : memref<400x2xf32, #tpu.memory_space<vmem>>, vector<1x2xf32>
    %15 = arith.addf %10, %14 : vector<1x2xf32>
    %c0_8 = arith.constant 0 : index
    %c3 = arith.constant 3 : index
    %16 = memref.load %arg0[%c0_8, %c3] : memref<2x8xi32, #tpu.memory_space<smem>>
    %c150_i32 = arith.constant 150 : i32
    %17 = arith.addi %c150_i32, %16 : i32
    %18 = arith.index_cast %17 : i32 to index
    %c0_9 = arith.constant 0 : index
    %19 = vector.load %arg1[%18, %c0_9] : memref<400x2xf32, #tpu.memory_space<vmem>>, vector<1x2xf32>
    %20 = arith.addf %15, %19 : vector<1x2xf32>
    %c0_10 = arith.constant 0 : index
    %c4 = arith.constant 4 : index
    %21 = memref.load %arg0[%c0_10, %c4] : memref<2x8xi32, #tpu.memory_space<smem>>
    %c200_i32 = arith.constant 200 : i32
    %22 = arith.addi %c200_i32, %21 : i32
    %23 = arith.index_cast %22 : i32 to index
    %c0_11 = arith.constant 0 : index
    %24 = vector.load %arg1[%23, %c0_11] : memref<400x2xf32, #tpu.memory_space<vmem>>, vector<1x2xf32>
    %25 = arith.addf %20, %24 : vector<1x2xf32>
    %c0_12 = arith.constant 0 : index
    %c5 = arith.constant 5 : index
    %26 = memref.load %arg0[%c0_12, %c5] : memref<2x8xi32, #tpu.memory_space<smem>>
    %c250_i32 = arith.constant 250 : i32
    %27 = arith.addi %c250_i32, %26 : i32
    %28 = arith.index_cast %27 : i32 to index
    %c0_13 = arith.constant 0 : index
    %29 = vector.load %arg1[%28, %c0_13] : memref<400x2xf32, #tpu.memory_space<vmem>>, vector<1x2xf32>
    %30 = arith.addf %25, %29 : vector<1x2xf32>
    %c0_14 = arith.constant 0 : index
    %c6 = arith.constant 6 : index
    %31 = memref.load %arg0[%c0_14, %c6] : memref<2x8xi32, #tpu.memory_space<smem>>
    %c300_i32 = arith.constant 300 : i32
    %32 = arith.addi %c300_i32, %31 : i32
    %33 = arith.index_cast %32 : i32 to index
    %c0_15 = arith.constant 0 : index
    %34 = vector.load %arg1[%33, %c0_15] : memref<400x2xf32, #tpu.memory_space<vmem>>, vector<1x2xf32>
    %35 = arith.addf %30, %34 : vector<1x2xf32>
    %c0_16 = arith.constant 0 : index
    %c7 = arith.constant 7 : index
    %36 = memref.load %arg0[%c0_16, %c7] : memref<2x8xi32, #tpu.memory_space<smem>>
    %c350_i32 = arith.constant 350 : i32
    %37 = arith.addi %c350_i32, %36 : i32
    %38 = arith.index_cast %37 : i32 to index
    %c0_17 = arith.constant 0 : index
    %39 = vector.load %arg1[%38, %c0_17] : memref<400x2xf32, #tpu.memory_space<vmem>>, vector<1x2xf32>
    %40 = arith.addf %35, %39 : vector<1x2xf32>
    %c1_18 = arith.constant 1 : index
    %c0_19 = arith.constant 0 : index
    %41 = memref.load %arg0[%c1_18, %c0_19] : memref<2x8xi32, #tpu.memory_space<smem>>
    %c0_i32_20 = arith.constant 0 : i32
    %42 = arith.addi %c0_i32_20, %41 : i32
    %43 = arith.index_cast %42 : i32 to index
    %c0_21 = arith.constant 0 : index
    %44 = vector.load %arg1[%43, %c0_21] : memref<400x2xf32, #tpu.memory_space<vmem>>, vector<1x2xf32>
    %45 = arith.addf %0, %44 : vector<1x2xf32>
    %c1_22 = arith.constant 1 : index
    %c1_23 = arith.constant 1 : index
    %46 = memref.load %arg0[%c1_22, %c1_23] : memref<2x8xi32, #tpu.memory_space<smem>>
    %c50_i32_24 = arith.constant 50 : i32
    %47 = arith.addi %c50_i32_24, %46 : i32
    %48 = arith.index_cast %47 : i32 to index
    %c0_25 = arith.constant 0 : index
    %49 = vector.load %arg1[%48, %c0_25] : memref<400x2xf32, #tpu.memory_space<vmem>>, vector<1x2xf32>
    %50 = arith.addf %45, %49 : vector<1x2xf32>
    %c1_26 = arith.constant 1 : index
    %c2_27 = arith.constant 2 : index
    %51 = memref.load %arg0[%c1_26, %c2_27] : memref<2x8xi32, #tpu.memory_space<smem>>
    %c100_i32_28 = arith.constant 100 : i32
    %52 = arith.addi %c100_i32_28, %51 : i32
    %53 = arith.index_cast %52 : i32 to index
    %c0_29 = arith.constant 0 : index
    %54 = vector.load %arg1[%53, %c0_29] : memref<400x2xf32, #tpu.memory_space<vmem>>, vector<1x2xf32>
    %55 = arith.addf %50, %54 : vector<1x2xf32>
    %c1_30 = arith.constant 1 : index
    %c3_31 = arith.constant 3 : index
    %56 = memref.load %arg0[%c1_30, %c3_31] : memref<2x8xi32, #tpu.memory_space<smem>>
    %c150_i32_32 = arith.constant 150 : i32
    %57 = arith.addi %c150_i32_32, %56 : i32
    %58 = arith.index_cast %57 : i32 to index
    %c0_33 = arith.constant 0 : index
    %59 = vector.load %arg1[%58, %c0_33] : memref<400x2xf32, #tpu.memory_space<vmem>>, vector<1x2xf32>
    %60 = arith.addf %55, %59 : vector<1x2xf32>
    %c1_34 = arith.constant 1 : index
    %c4_35 = arith.constant 4 : index
    %61 = memref.load %arg0[%c1_34, %c4_35] : memref<2x8xi32, #tpu.memory_space<smem>>
    %c200_i32_36 = arith.constant 200 : i32
    %62 = arith.addi %c200_i32_36, %61 : i32
    %63 = arith.index_cast %62 : i32 to index
    %c0_37 = arith.constant 0 : index
    %64 = vector.load %arg1[%63, %c0_37] : memref<400x2xf32, #tpu.memory_space<vmem>>, vector<1x2xf32>
    %65 = arith.addf %60, %64 : vector<1x2xf32>
    %c1_38 = arith.constant 1 : index
    %c5_39 = arith.constant 5 : index
    %66 = memref.load %arg0[%c1_38, %c5_39] : memref<2x8xi32, #tpu.memory_space<smem>>
    %c250_i32_40 = arith.constant 250 : i32
    %67 = arith.addi %c250_i32_40, %66 : i32
    %68 = arith.index_cast %67 : i32 to index
    %c0_41 = arith.constant 0 : index
    %69 = vector.load %arg1[%68, %c0_41] : memref<400x2xf32, #tpu.memory_space<vmem>>, vector<1x2xf32>
    %70 = arith.addf %65, %69 : vector<1x2xf32>
    %c1_42 = arith.constant 1 : index
    %c6_43 = arith.constant 6 : index
    %71 = memref.load %arg0[%c1_42, %c6_43] : memref<2x8xi32, #tpu.memory_space<smem>>
    %c300_i32_44 = arith.constant 300 : i32
    %72 = arith.addi %c300_i32_44, %71 : i32
    %73 = arith.index_cast %72 : i32 to index
    %c0_45 = arith.constant 0 : index
    %74 = vector.load %arg1[%73, %c0_45] : memref<400x2xf32, #tpu.memory_space<vmem>>, vector<1x2xf32>
    %75 = arith.addf %70, %74 : vector<1x2xf32>
    %c1_46 = arith.constant 1 : index
    %c7_47 = arith.constant 7 : index
    %76 = memref.load %arg0[%c1_46, %c7_47] : memref<2x8xi32, #tpu.memory_space<smem>>
    %c350_i32_48 = arith.constant 350 : i32
    %77 = arith.addi %c350_i32_48, %76 : i32
    %78 = arith.index_cast %77 : i32 to index
    %c0_49 = arith.constant 0 : index
    %79 = vector.load %arg1[%78, %c0_49] : memref<400x2xf32, #tpu.memory_space<vmem>>, vector<1x2xf32>
    %80 = arith.addf %75, %79 : vector<1x2xf32>
    %81 = tpu.concatenate %40, %80 in 0 : vector<1x2xf32>, vector<1x2xf32> -> vector<2x2xf32>
    %cst = arith.constant dense<0xFF800000> : vector<2xf32>
    %82 = vector.multi_reduction <maximumf>, %81, %cst [1] : vector<2x2xf32> to vector<2xf32>
    %83 = vector.shape_cast %82 : vector<2xf32> to vector<2x1xf32>
    %84 = vector.broadcast %83 : vector<2x1xf32> to vector<2x2xf32>
    %85 = arith.subf %81, %84 : vector<2x2xf32>
    %86 = math.exp %85 : vector<2x2xf32>
    %cst_50 = arith.constant dense<0.000000e+00> : vector<2xf32>
    %87 = vector.multi_reduction <add>, %86, %cst_50 [1] : vector<2x2xf32> to vector<2xf32>
    %88 = vector.shape_cast %87 : vector<2xf32> to vector<2x1xf32>
    %89 = math.log %88 : vector<2x1xf32>
    %90 = arith.addf %83, %89 : vector<2x1xf32>
    %91 = vector.broadcast %90 : vector<2x1xf32> to vector<2x2xf32>
    %92 = arith.subf %81, %91 : vector<2x2xf32>
    %c0_51 = arith.constant 0 : index
    %c0_52 = arith.constant 0 : index
    %93 = vector.load %arg3[%c0_51, %c0_52] : memref<2x2xf32, #tpu.memory_space<vmem>>, vector<2x2xf32>
    tpu.vector_store %arg3[%c0_51, %c0_52], %92 {strides = array<i32>} : memref<2x2xf32, #tpu.memory_space<vmem>>, vector<2x2xf32>,
    return
  }
}

</mosaic_0001>

<llo_original>
// kernel: model_forward.1
$region0: #{model_forward.1}
  #allocation0 [shape = 'u32[]', space=smem, size = 0x4, offset = 0x4, fixed_abs, tag = 'smem constant byte address 0x4 - core index']
  #allocation1 [shape = 'u32[144,128]{1,0:T(1,128)}', space=vmem, size = 0x12000, scoped, tag = 'internal scratch']
  %s0 = inlined_call_operand.vmem [shape: s32[2,8], index: 0, kind: input, shape index: {}]
  %s1 = inlined_call_operand.vmem [shape: f32[400,2], index: 1, kind: input, shape index: {}]
  %s2 = inlined_call_operand.vmem [shape: f32[1,2], index: 2, kind: input, shape index: {}]
  %s3 = inlined_call_operand.hbm [shape: f32[2,2], index: 3, kind: output, shape index: {}]
  %s4 = sld [smem:[#allocation0]]
  $region26: #{model_forward.1} parent=0
    _
  %s6 = ssub.s32 1, %s4
  %s7 = scalar_select 0, %s6, %s4
  $region1: #{model_forward.1} parent=0
    #allocation2 [shape = 'u8[1024]{0}', space=smem, size = 0x400, scoped, tag = 'input window, operand 0, single buffered']
    #allocation3 [shape = 's32[1]{0}', space=sflag, size = 0x4, scoped, tag = 'scoped memory for model_forward.1']
    #allocation4 [shape = 's32[1]{0}', space=sflag, size = 0x4, scoped, tag = 'scoped memory for model_forward.1']
    #allocation5 [shape = 'u8[1024]{0}', space=vmem, size = 0x400, scoped, tag = 'output window, operand 0, single buffered']
    %8 = vsyncpa [#allocation4], 0
    %9 = vsyncpa [#allocation3], 0
    // Predicated region
    $region2: #{model_forward.1} parent=1 // pred_check
      _
    $region3: #{model_forward.1} parent=1 // pred_check_branch
      %11 = sbr.rel (0) target = $region5
    $region4: #{model_forward.1} parent=1 // pred_region
      %s13 = ssub.s32 32, 32
      %14 = vsyncadd [#allocation4], %s13
      %s16 = sshll.u32 %s0, 4
      %s17 = int_to_ptr.vmem [resolvable:$true] %s16
      %19 = dma.vmem_to_smem %s17, 32, [#allocation2], [#allocation4]
    $region5: #{model_forward.1} parent=1 // pred_fallthru
      _
    // Predicated region
    $region6: #{model_forward.1} parent=1 // pred_check
      _
    $region7: #{model_forward.1} parent=1 // pred_check_branch
      %21 = sbr.rel (0) target = $region9
    $region8: #{model_forward.1} parent=1 // pred_region
      _
    $region9: #{model_forward.1} parent=1 // pred_fallthru
      _
    // Predicated region
    $region10: #{model_forward.1} parent=1 // pred_check
      _
    $region11: #{model_forward.1} parent=1 // pred_check_branch
      %23 = sbr.rel (0) target = $region13
    $region12: #{model_forward.1} parent=1 // pred_region
      _
    $region13: #{model_forward.1} parent=1 // pred_fallthru
      _
    // Predicated region
    $region14: #{model_forward.1} parent=1 // pred_check
      _
    $region15: #{model_forward.1} parent=1 // pred_check_branch
      %25 = sbr.rel (0) target = $region17
    $region16: #{model_forward.1} parent=1 // pred_region
      %26 = dma.done [#allocation4], 32
    $region17: #{model_forward.1} parent=1 // pred_fallthru
      _
    %27 = sfence
    %v28 = vld [vmem:[%s2] sm:$0x1]
    %s29 = sld [smem:[#allocation2]]
    %s30 = scalar_lea.vmem %s1, %s29
    %v31 = vld [vmem:[%s30] sm:$0x1]
    %v32 = vadd.f32 %v28, %v31
    %s33 = sld [smem:[#allocation2 + $0x1]]
    %s34 = sadd.s32 %s33, 50
    %s35 = scalar_lea.vmem %s1, %s34
    %v36 = vld [vmem:[%s35] sm:$0x1]
    %v37 = vadd.f32 %v32, %v36
    %s38 = sld [smem:[#allocation2 + $0x2]]
    %s39 = sadd.s32 %s38, 100
    %s40 = scalar_lea.vmem %s1, %s39
    %v41 = vld [vmem:[%s40] sm:$0x1]
    %v42 = vadd.f32 %v37, %v41
    %s43 = sld [smem:[#allocation2 + $0x3]]
    %s44 = sadd.s32 %s43, 150
    %s45 = scalar_lea.vmem %s1, %s44
    %v46 = vld [vmem:[%s45] sm:$0x1]
    %v47 = vadd.f32 %v42, %v46
    %s48 = sld [smem:[#allocation2 + $0x4]]
    %s49 = sadd.s32 %s48, 200
    %s50 = scalar_lea.vmem %s1, %s49
    %v51 = vld [vmem:[%s50] sm:$0x1]
    %v52 = vadd.f32 %v47, %v51
    %s53 = sld [smem:[#allocation2 + $0x5]]
    %s54 = sadd.s32 %s53, 250
    %s55 = scalar_lea.vmem %s1, %s54
    %v56 = vld [vmem:[%s55] sm:$0x1]
    %v57 = vadd.f32 %v52, %v56
    %s58 = sld [smem:[#allocation2 + $0x6]]
    %s59 = sadd.s32 %s58, 300
    %s60 = scalar_lea.vmem %s1, %s59
    %v61 = vld [vmem:[%s60] sm:$0x1]
    %v62 = vadd.f32 %v57, %v61
    %s63 = sld [smem:[#allocation2 + $0x7]]
    %s64 = sadd.s32 %s63, 350
    %s65 = scalar_lea.vmem %s1, %s64
    %v66 = vld [vmem:[%s65] sm:$0x1]
    %v67 = vadd.f32 %v62, %v66
    %s68 = sld [smem:[#allocation2 + $0x80]]
    %s69 = scalar_lea.vmem %s1, %s68
    %v70 = vld [vmem:[%s69] sm:$0x1]
    %v71 = vadd.f32 %v28, %v70
    %s72 = sld [smem:[#allocation2 + $0x81]]
    %s73 = sadd.s32 %s72, 50
    %s74 = scalar_lea.vmem %s1, %s73
    %v75 = vld [vmem:[%s74] sm:$0x1]
    %v76 = vadd.f32 %v71, %v75
    %s77 = sld [smem:[#allocation2 + $0x82]]
    %s78 = sadd.s32 %s77, 100
    %s79 = scalar_lea.vmem %s1, %s78
    %v80 = vld [vmem:[%s79] sm:$0x1]
    %v81 = vadd.f32 %v76, %v80
    %s82 = sld [smem:[#allocation2 + $0x83]]
    %s83 = sadd.s32 %s82, 150
    %s84 = scalar_lea.vmem %s1, %s83
    %v85 = vld [vmem:[%s84] sm:$0x1]
    %v86 = vadd.f32 %v81, %v85
    %s87 = sld [smem:[#allocation2 + $0x84]]
    %s88 = sadd.s32 %s87, 200
    %s89 = scalar_lea.vmem %s1, %s88
    %v90 = vld [vmem:[%s89] sm:$0x1]
    %v91 = vadd.f32 %v86, %v90
    %s92 = sld [smem:[#allocation2 + $0x85]]
    %s93 = sadd.s32 %s92, 250
    %s94 = scalar_lea.vmem %s1, %s93
    %v95 = vld [vmem:[%s94] sm:$0x1]
    %v96 = vadd.f32 %v91, %v95
    %s97 = sld [smem:[#allocation2 + $0x86]]
    %s98 = sadd.s32 %s97, 300
    %s99 = scalar_lea.vmem %s1, %s98
    %v100 = vld [vmem:[%s99] sm:$0x1]
    %v101 = vadd.f32 %v96, %v100
    %s102 = sld [smem:[#allocation2 + $0x87]]
    %s103 = sadd.s32 %s102, 350
    %s104 = scalar_lea.vmem %s1, %s103
    %v105 = vld [vmem:[%s104] sm:$0x1]
    %v106 = vadd.f32 %v101, %v105
    %v108 = vlaneseq
    %v109 = vshrl.u32 %v108, 7
    %v110 = vsub.s32 0, %v109
    %v111 = vrot.slane %v106, %v110
    %vm113 = vcmask 1040384
    %v114 = vsel %vm113, %v67, %v111
    %vm115 = vcmask 9216
    %v116 = vsel %vm115, %v114, -inf
    %117 = vmax.xlane.f32.xlu0 %v116
    %v118 = vpop.xlane.xlu0 %117
    %v119 = vsub.f32 %v114, %v118
    %v120 = vmul.f32 %v119, 1.442695
    %v121 = vpow.pop %v120
    %v122 = vsel %vm115, %v121, 0.0
    %123 = vadd.xlane.f32.xlu0 %v122
    %v124 = vpop.xlane.xlu0 %123
    %v125 = vlog2.pop %v124
    %v126 = vmul.f32 %v125, 0.6931472
    %v127 = vadd.f32 %v118, %v126
    %v128 = vsub.f32 %v114, %v127
    %129 = vst.msk [vmem:[#allocation5] sm:$0x3] %vm115, %v128
    // Predicated region
    $region18: #{model_forward.1} parent=1 // pred_check
      _
    $region19: #{model_forward.1} parent=1 // pred_check_branch
      %131 = sbr.rel (0) target = $region21
    $region20: #{model_forward.1} parent=1 // pred_region
      %s133 = ssub.s32 32, 32
      %134 = vsyncadd [#allocation3], %s133
      %s136 = sshll.u32 [#allocation5], 4
      %s137 = int_to_ptr.vmem [resolvable:$true] %s136
      %139 = dma.vmem_to_hbm [thread:$0]  %s137, 32, %s3, [#allocation3]
    $region21: #{model_forward.1} parent=1 // pred_fallthru
      _
    // Predicated region
    $region22: #{model_forward.1} parent=1 // pred_check
      _
    $region23: #{model_forward.1} parent=1 // pred_check_branch
      %141 = sbr.rel (0) target = $region25
    $region24: #{model_forward.1} parent=1 // pred_region
      %142 = dma.done [#allocation3], 32
    $region25: #{model_forward.1} parent=1 // pred_fallthru
      _
    %143 = vsyncpa [#allocation3], 1
    %144 = vsyncpa [#allocation4], 1

</llo_original>
